<compile_context>
chip_gen: v5e
topology: v5e:2x2
jax: 0.10.0
libtpu: 0.0.40
codegen_flags: <defaults>
</compile_context>

<pallas_src>
import jax
import jax.numpy as jnp
from jax.experimental import pallas as pl
from jax.experimental.pallas import tpu as pltpu


def _round_up(v, m):
    return (v + m - 1) // m * m


def _vmem_capacity_bytes():
    try:
        return int(getattr(pltpu.get_tpu_info(), "vmem_capacity_bytes", 64 * 2**20))
    except Exception:
        return 64 * 2**20          # v7x-safe default


def _vmem_limit_bytes():
    cap = _vmem_capacity_bytes()
    return int(max(32 * 2**20, min(100 * 2**20, (cap * 3) // 4)))


def _pick_tile_n(n, c1p, fp):
    """Generation-aware point-tile size: big enough to amortize per-step overhead,
    small enough that the f32 h1/h2 temporaries stay well inside VMEM."""
    budget = max(_vmem_capacity_bytes() // 8, 2 * 2**20)
    per_row = 4 * (c1p + fp) * 2          # f32 h1 + h2 temporaries, 2x headroom
    t = int(max(16, min(n, budget // per_row)))
    t -= t % 16
    while t > 16 and n % t != 0:
        t -= 16
    if t < 16 or n % t != 0:
        t = n
    return t


def _pointnet_stats_kernel(x_ref, w1_ref, s1_ref, t1_ref, w2_ref,
                           omax_ref, omin_ref, osum_ref, osq_ref,
                           smax, smin, ssum, ssq):
    """One point-tile of one cloud: mlp1 (bias absorbed) + BN1 affine + ReLU,
    mlp2 (bias absorbed), then running per-batch max/min/sum/sumsq of pre-BN h2."""
    t = pl.program_id(1)                                             # point-tile index

    x = x_ref[...]                                                   # (tile_n, D) bf16
    h1 = jnp.dot(x, w1_ref[...],
                 preferred_element_type=jnp.float32)                 # (tile_n, C1P) f32
    h1 = jnp.maximum(h1 * s1_ref[...] + t1_ref[...], 0.0)            # BN1 + ReLU

    h2 = jnp.dot(h1.astype(jnp.bfloat16), w2_ref[...],
                 preferred_element_type=jnp.float32)                 # (tile_n, FP) f32

    tmax = jnp.max(h2, axis=0, keepdims=True)                        # (1, FP)
    tmin = jnp.min(h2, axis=0, keepdims=True)
    tsum = jnp.sum(h2, axis=0, keepdims=True)
    tsq = jnp.sum(h2 * h2, axis=0, keepdims=True)

    @pl.when(t == 0)
    def _():                                                         # fresh batch
        smax[...] = tmax
        smin[...] = tmin
        ssum[...] = tsum
        ssq[...] = tsq

    @pl.when(t != 0)
    def _():
        smax[...] = jnp.maximum(smax[...], tmax)
        smin[...] = jnp.minimum(smin[...], tmin)
        ssum[...] = ssum[...] + tsum
        ssq[...] = ssq[...] + tsq

    # Canonical accumulator pattern: copy running stats to the per-batch output
    # block every step (blocks are indexed by batch, so the last write per batch
    # is the one persisted).  Outputs are lane-dense (last dim = FP >= 128).
    omax_ref[...] = smax[...]
    omin_ref[...] = smin[...]
    osum_ref[...] = ssum[...]
    osq_ref[...] = ssq[...]


def global_model_forward(x, params, *, tile_n=None, eps=1e-5):
    """x: (B, N, D) float32 point clouds. Returns (B, num_classes) softmax probs."""
    B, N, D = x.shape
    M = B * N
    w1 = params["w1t"]                     # (D, C1P)  bf16
    w2 = params["w2t"]                     # (C1P, FP) bf16
    C1P = w1.shape[1]
    FP = w2.shape[1]

    if tile_n is None:
        tile_n = _pick_tile_n(N, C1P, FP)
    assert N % tile_n == 0, "tile_n must divide N"
    assert tile_n == N or tile_n % 16 == 0, "bf16 point tiles need sublane multiple of 16"
    T = N // tile_n

    x_bf = x.astype(jnp.bfloat16)          # halve the dominant HBM stream

    # ---- BN1 train-mode moments in closed form from tiny x statistics (XLA) ----
    # mean1 = mean(x@W1), E[(x@W1)^2]_c = (w_c^T Gram w_c)/M.  The conv bias b1
    # cancels exactly in train-mode BN, so it never appears.
    xf = x_bf.reshape(M, D).astype(jnp.float32)
    sum_x = jnp.sum(xf, axis=0)                                        # (D,)
    gram = jnp.dot(xf.T, xf, preferred_element_type=jnp.float32)       # (D, D)
    w1f = w1.astype(jnp.float32)                                       # (D, C1P)
    mean1 = (sum_x @ w1f) / M                                          # (C1P,)
    ex2 = jnp.einsum("de,dc,ec->c", gram, w1f, w1f) / M                # (C1P,)
    var1 = jnp.maximum(ex2 - mean1 * mean1, 0.0)
    scale1 = (params["g1"].reshape(-1) * jax.lax.rsqrt(var1 + eps)).reshape(1, C1P)
    shift1 = params["be1"].reshape(1, C1P) - mean1.reshape(1, C1P) * scale1

    stat_shape = jax.ShapeDtypeStruct((B, 1, FP), jnp.float32)
    out_spec = pl.BlockSpec((None, 1, FP), lambda b, t: (b, 0, 0))

    omax, omin, osum, osq = pl.pallas_call(
        _pointnet_stats_kernel,
        out_shape=(stat_shape, stat_shape, stat_shape, stat_shape),
        grid_spec=pltpu.PrefetchScalarGridSpec(
            num_scalar_prefetch=0,
            grid=(B, T),                               # batch (parallel) x point-tile
            in_specs=[
                pl.BlockSpec((None, tile_n, D), lambda b, t: (b, t, 0)),  # x tiles
                pl.BlockSpec((D, C1P), lambda b, t: (0, 0)),              # W1 (resident)
                pl.BlockSpec((1, C1P), lambda b, t: (0, 0)),              # BN1 scale
                pl.BlockSpec((1, C1P), lambda b, t: (0, 0)),              # BN1 shift
                pl.BlockSpec((C1P, FP), lambda b, t: (0, 0)),             # W2 (resident)
            ],
            out_specs=[out_spec, out_spec, out_spec, out_spec],
            scratch_shapes=[pltpu.VMEM((1, FP), jnp.float32) for _ in range(4)]),
        compiler_params=pltpu.CompilerParams(
            dimension_semantics=("parallel", "arbitrary"),
            vmem_limit_bytes=_vmem_limit_bytes()),
    )(x_bf, w1, scale1, shift1, w2)

    omax = omax.reshape(B, FP)
    omin = omin.reshape(B, FP)
    sum2 = jnp.sum(osum.reshape(B, FP), axis=0, keepdims=True)          # (1, FP)
    sq2 = jnp.sum(osq.reshape(B, FP), axis=0, keepdims=True)

    # ---- BN2 finalize + max-pool + fc -> ProtoNet fc -> softmax (tiny, exact XLA) ----
    mean2 = sum2 / M
    var2 = jnp.maximum(sq2 / M - mean2 * mean2, 0.0)
    s2 = params["g2"] * jax.lax.rsqrt(var2 + eps)                        # (1, FP)
    sh2 = params["be2"] - mean2 * s2                                     # b2 cancels in BN
    # max_n relu(s2*h2 + sh2) = relu(s2 * (max_n or min_n h2, by sign of s2) + sh2)
    pooled = jnp.maximum(jnp.where(s2 >= 0.0, omax, omin) * s2 + sh2, 0.0)   # (B, FP)

    feat = pooled @ params["wfct"] + params["bfc"]                       # PointNetPP.fc
    logits = feat @ params["wpt"] + params["bp"]                         # ProtoNet.fc
    return jax.nn.softmax(logits, axis=1)


def init_params(key, input_dim, feature_dim, num_classes):
    """Pre-transposed (in, out) weights, zero-padded to lane width (128)."""
    C1 = 64
    C1P = _round_up(C1, 128)
    FP = _round_up(feature_dim, 128)
    ks = jax.random.split(key, 12)
    scale = 0.1

    def pad2(a, shape):
        out = jnp.zeros(shape, jnp.float32)
        return out.at[: a.shape[0], : a.shape[1]].set(a)

    w1 = jax.random.normal(ks[0], (input_dim, C1), jnp.float32) * scale
    b1 = jax.random.normal(ks[1], (1, C1), jnp.float32) * scale
    g1 = 1.0 + 0.2 * jax.random.normal(ks[2], (1, C1), jnp.float32)
    be1 = 0.1 * jax.random.normal(ks[3], (1, C1), jnp.float32)
    w2 = jax.random.normal(ks[4], (C1, feature_dim), jnp.float32) * scale
    b2 = jax.random.normal(ks[5], (1, feature_dim), jnp.float32) * scale
    g2 = 1.0 + 0.2 * jax.random.normal(ks[6], (1, feature_dim), jnp.float32)
    be2 = 0.1 * jax.random.normal(ks[7], (1, feature_dim), jnp.float32)
    wfc = jax.random.normal(ks[8], (feature_dim, feature_dim), jnp.float32) * scale
    bfc = jax.random.normal(ks[9], (1, feature_dim), jnp.float32) * scale
    wp = jax.random.normal(ks[10], (feature_dim, num_classes), jnp.float32) * scale
    bp = jax.random.normal(ks[11], (1, num_classes), jnp.float32) * scale

    return {
        "w1t": pad2(w1, (input_dim, C1P)).astype(jnp.bfloat16),
        "b1": pad2(b1, (1, C1P)),
        "g1": pad2(g1, (1, C1P)),
        "be1": pad2(be1, (1, C1P)),
        "w2t": pad2(w2, (C1P, FP)).astype(jnp.bfloat16),
        "b2": pad2(b2, (1, FP)),
        "g2": pad2(g2, (1, FP)),
        "be2": pad2(be2, (1, FP)),
        "wfct": pad2(wfc, (FP, FP)),
        "bfc": pad2(bfc, (1, FP)),
        "wpt": pad2(wp, (FP, num_classes)),
        "bp": bp,
    }


def _reference_forward(x, params, eps=1e-5):
    """Pure-JAX reference, faithful to the PyTorch forward (train-mode BN, biases
    included) with the same bf16 matmul rounding as the kernel path."""
    B, N, _ = x.shape
    xf = x.astype(jnp.bfloat16).reshape(B * N, -1)
    h1 = jnp.dot(xf, params["w1t"], preferred_element_type=jnp.float32) + params["b1"]
    m1 = jnp.mean(h1, axis=0, keepdims=True)
    v1 = jnp.mean((h1 - m1) ** 2, axis=0, keepdims=True)
    h1 = jnp.maximum((h1 - m1) * jax.lax.rsqrt(v1 + eps) * params["g1"] + params["be1"], 0.0)
    h2 = jnp.dot(h1.astype(jnp.bfloat16), params["w2t"],
                 preferred_element_type=jnp.float32) + params["b2"]
    m2 = jnp.mean(h2, axis=0, keepdims=True)
    v2 = jnp.mean((h2 - m2) ** 2, axis=0, keepdims=True)
    h2 = jnp.maximum((h2 - m2) * jax.lax.rsqrt(v2 + eps) * params["g2"] + params["be2"], 0.0)
    pooled = jnp.max(h2.reshape(B, N, -1), axis=1)
    feat = pooled @ params["wfct"] + params["bfc"]
    logits = feat @ params["wpt"] + params["bp"]
    return jax.nn.softmax(logits, axis=1)


if __name__ == "__main__":
    B, N, D = 2, 64, 4            # batch, points per cloud, input_dim
    FEATURE_DIM, NUM_CLASSES = 32, 8
    TILE_N = 16                   # 4 point-tiles per cloud -> exercises the accumulators

    key = jax.random.PRNGKey(0)
    kx, kp = jax.random.split(key)
    x = jax.random.normal(kx, (B, N, D), jnp.float32)
    params = init_params(kp, D, FEATURE_DIM, NUM_CLASSES)

    out = global_model_forward(x, params, tile_n=TILE_N)
    out = jax.block_until_ready(out)

    assert out.shape == (B, NUM_CLASSES)
    # softmax rows sum to 1 (exact XLA softmax now)
    assert bool(jnp.all(jnp.abs(jnp.sum(out, axis=1) - 1.0) < 1e-4))
    # matches the faithful pure-JAX reference forward
    ref = _reference_forward(x, params)
    assert bool(jnp.all(jnp.abs(out - ref) < 1e-2))
    print("KERNEL_OK")
</pallas_src>

<mosaic_0001>
module attributes {stable_mosaic.version = 11 : i64} {
  func.func @_pointnet_stats_kernel(%arg0: i32, %arg1: i32, %arg2: memref<1x16x4xbf16, #tpu.memory_space<vmem>>, %arg3: memref<4x128xbf16, #tpu.memory_space<vmem>>, %arg4: memref<1x128xf32, #tpu.memory_space<vmem>>, %arg5: memref<1x128xf32, #tpu.memory_space<vmem>>, %arg6: memref<128x128xbf16, #tpu.memory_space<vmem>>, %arg7: memref<1x1x128xf32, #tpu.memory_space<vmem>>, %arg8: memref<1x1x128xf32, #tpu.memory_space<vmem>>, %arg9: memref<1x1x128xf32, #tpu.memory_space<vmem>>, %arg10: memref<1x1x128xf32, #tpu.memory_space<vmem>>, %arg11: memref<1x128xf32, #tpu.memory_space<vmem>>, %arg12: memref<1x128xf32, #tpu.memory_space<vmem>>, %arg13: memref<1x128xf32, #tpu.memory_space<vmem>>, %arg14: memref<1x128xf32, #tpu.memory_space<vmem>>) attributes {dimension_semantics = [#tpu.dimension_semantics<parallel>, #tpu.dimension_semantics<arbitrary>], iteration_bounds = array<i64: 2, 4>, scalar_prefetch = 0 : i64, scratch_operands = 4 : i64, tpu.core_type = #tpu.core_type<tc>, window_params = [{transform_indices = @transform_0, window_bounds = array<i64: 1, 16, 4>}, {pipeline_mode = #tpu.pipeline_mode<synchronous>, transform_indices = @transform_1, window_bounds = array<i64: 4, 128>}, {pipeline_mode = #tpu.pipeline_mode<synchronous>, transform_indices = @transform_2, window_bounds = array<i64: 1, 128>}, {pipeline_mode = #tpu.pipeline_mode<synchronous>, transform_indices = @transform_3, window_bounds = array<i64: 1, 128>}, {pipeline_mode = #tpu.pipeline_mode<synchronous>, transform_indices = @transform_4, window_bounds = array<i64: 128, 128>}, {transform_indices = @transform_5, window_bounds = array<i64: 1, 1, 128>}, {transform_indices = @transform_6, window_bounds = array<i64: 1, 1, 128>}, {transform_indices = @transform_7, window_bounds = array<i64: 1, 1, 128>}, {transform_indices = @transform_8, window_bounds = array<i64: 1, 1, 128>}]} {
    %c0 = arith.constant 0 : index
    %c0_0 = arith.constant 0 : index
    %c0_1 = arith.constant 0 : index
    %0 = vector.load %arg2[%c0, %c0_0, %c0_1] : memref<1x16x4xbf16, #tpu.memory_space<vmem>>, vector<1x16x4xbf16>
    %1 = vector.shape_cast %0 : vector<1x16x4xbf16> to vector<16x4xbf16>
    %c0_2 = arith.constant 0 : index
    %c0_3 = arith.constant 0 : index
    %2 = vector.load %arg3[%c0_2, %c0_3] : memref<4x128xbf16, #tpu.memory_space<vmem>>, vector<4x128xbf16>
    %cst = arith.constant dense<0.000000e+00> : vector<16x128xf32>
    %3 = tpu.matmul %1, %2, %cst {dimension_numbers = #tpu.dot_dimension_numbers<[1], [0], [0], [1], [0, 0, 1, 1], [], []>} : vector<16x4xbf16>, vector<4x128xbf16>, vector<16x128xf32> -> vector<16x128xf32>
    %c0_4 = arith.constant 0 : index
    %c0_5 = arith.constant 0 : index
    %4 = vector.load %arg4[%c0_4, %c0_5] : memref<1x128xf32, #tpu.memory_space<vmem>>, vector<1x128xf32>
    %5 = vector.broadcast %4 : vector<1x128xf32> to vector<16x128xf32>
    %6 = arith.mulf %3, %5 : vector<16x128xf32>
    %c0_6 = arith.constant 0 : index
    %c0_7 = arith.constant 0 : index
    %7 = vector.load %arg5[%c0_6, %c0_7] : memref<1x128xf32, #tpu.memory_space<vmem>>, vector<1x128xf32>
    %8 = vector.broadcast %7 : vector<1x128xf32> to vector<16x128xf32>
    %9 = arith.addf %6, %8 : vector<16x128xf32>
    %cst_8 = arith.constant 0.000000e+00 : f32
    %10 = vector.broadcast %cst_8 : f32 to vector<16x128xf32>
    %11 = arith.maximumf %9, %10 : vector<16x128xf32>
    %12 = arith.truncf %11 : vector<16x128xf32> to vector<16x128xbf16>
    %c0_9 = arith.constant 0 : index
    %c0_10 = arith.constant 0 : index
    %13 = vector.load %arg6[%c0_9, %c0_10] : memref<128x128xbf16, #tpu.memory_space<vmem>>, vector<128x128xbf16>
    %cst_11 = arith.constant dense<0.000000e+00> : vector<16x128xf32>
    %14 = tpu.matmul %12, %13, %cst_11 {dimension_numbers = #tpu.dot_dimension_numbers<[1], [0], [0], [1], [0, 0, 1, 1], [], []>} : vector<16x128xbf16>, vector<128x128xbf16>, vector<16x128xf32> -> vector<16x128xf32>
    %cst_12 = arith.constant dense<0xFF800000> : vector<128xf32>
    %15 = vector.multi_reduction <maximumf>, %14, %cst_12 [0] : vector<16x128xf32> to vector<128xf32>
    %16 = vector.shape_cast %15 : vector<128xf32> to vector<1x128xf32>
    %cst_13 = arith.constant dense<0x7F800000> : vector<128xf32>
    %17 = vector.multi_reduction <minimumf>, %14, %cst_13 [0] : vector<16x128xf32> to vector<128xf32>
    %18 = vector.shape_cast %17 : vector<128xf32> to vector<1x128xf32>
    %cst_14 = arith.constant dense<0.000000e+00> : vector<128xf32>
    %19 = vector.multi_reduction <add>, %14, %cst_14 [0] : vector<16x128xf32> to vector<128xf32>
    %20 = vector.shape_cast %19 : vector<128xf32> to vector<1x128xf32>
    %21 = arith.mulf %14, %14 : vector<16x128xf32>
    %cst_15 = arith.constant dense<0.000000e+00> : vector<128xf32>
    %22 = vector.multi_reduction <add>, %21, %cst_15 [0] : vector<16x128xf32> to vector<128xf32>
    %23 = vector.shape_cast %22 : vector<128xf32> to vector<1x128xf32>
    %c0_i32 = arith.constant 0 : i32
    %24 = arith.cmpi eq, %arg1, %c0_i32 : i32
    %25 = arith.extui %24 : i1 to i32
    %c0_i32_16 = arith.constant 0 : i32
    %26 = arith.cmpi ne, %25, %c0_i32_16 : i32
    scf.if %26 {
      %c0_39 = arith.constant 0 : index
      %c0_40 = arith.constant 0 : index
      %46 = vector.load %arg11[%c0_39, %c0_40] : memref<1x128xf32, #tpu.memory_space<vmem>>, vector<1x128xf32>
      tpu.vector_store %arg11[%c0_39, %c0_40], %16 {strides = array<i32>} : memref<1x128xf32, #tpu.memory_space<vmem>>, vector<1x128xf32>,
      %c0_41 = arith.constant 0 : index
      %c0_42 = arith.constant 0 : index
      %47 = vector.load %arg12[%c0_41, %c0_42] : memref<1x128xf32, #tpu.memory_space<vmem>>, vector<1x128xf32>
      tpu.vector_store %arg12[%c0_41, %c0_42], %18 {strides = array<i32>} : memref<1x128xf32, #tpu.memory_space<vmem>>, vector<1x128xf32>,
      %c0_43 = arith.constant 0 : index
      %c0_44 = arith.constant 0 : index
      %48 = vector.load %arg13[%c0_43, %c0_44] : memref<1x128xf32, #tpu.memory_space<vmem>>, vector<1x128xf32>
      tpu.vector_store %arg13[%c0_43, %c0_44], %20 {strides = array<i32>} : memref<1x128xf32, #tpu.memory_space<vmem>>, vector<1x128xf32>,
      %c0_45 = arith.constant 0 : index
      %c0_46 = arith.constant 0 : index
      %49 = vector.load %arg14[%c0_45, %c0_46] : memref<1x128xf32, #tpu.memory_space<vmem>>, vector<1x128xf32>
      tpu.vector_store %arg14[%c0_45, %c0_46], %23 {strides = array<i32>} : memref<1x128xf32, #tpu.memory_space<vmem>>, vector<1x128xf32>,
    } else {
    }
    %c0_i32_17 = arith.constant 0 : i32
    %27 = arith.cmpi ne, %arg1, %c0_i32_17 : i32
    %28 = arith.extui %27 : i1 to i32
    %c0_i32_18 = arith.constant 0 : i32
    %29 = arith.cmpi ne, %28, %c0_i32_18 : i32
    scf.if %29 {
      %c0_39 = arith.constant 0 : index
      %c0_40 = arith.constant 0 : index
      %46 = vector.load %arg11[%c0_39, %c0_40] : memref<1x128xf32, #tpu.memory_space<vmem>>, vector<1x128xf32>
      %47 = arith.maximumf %46, %16 : vector<1x128xf32>
      %c0_41 = arith.constant 0 : index
      %c0_42 = arith.constant 0 : index
      %48 = vector.load %arg11[%c0_41, %c0_42] : memref<1x128xf32, #tpu.memory_space<vmem>>, vector<1x128xf32>
      tpu.vector_store %arg11[%c0_41, %c0_42], %47 {strides = array<i32>} : memref<1x128xf32, #tpu.memory_space<vmem>>, vector<1x128xf32>,
      %c0_43 = arith.constant 0 : index
      %c0_44 = arith.constant 0 : index
      %49 = vector.load %arg12[%c0_43, %c0_44] : memref<1x128xf32, #tpu.memory_space<vmem>>, vector<1x128xf32>
      %50 = arith.minimumf %49, %18 : vector<1x128xf32>
      %c0_45 = arith.constant 0 : index
      %c0_46 = arith.constant 0 : index
      %51 = vector.load %arg12[%c0_45, %c0_46] : memref<1x128xf32, #tpu.memory_space<vmem>>, vector<1x128xf32>
      tpu.vector_store %arg12[%c0_45, %c0_46], %50 {strides = array<i32>} : memref<1x128xf32, #tpu.memory_space<vmem>>, vector<1x128xf32>,
      %c0_47 = arith.constant 0 : index
      %c0_48 = arith.constant 0 : index
      %52 = vector.load %arg13[%c0_47, %c0_48] : memref<1x128xf32, #tpu.memory_space<vmem>>, vector<1x128xf32>
      %53 = arith.addf %52, %20 : vector<1x128xf32>
      %c0_49 = arith.constant 0 : index
      %c0_50 = arith.constant 0 : index
      %54 = vector.load %arg13[%c0_49, %c0_50] : memref<1x128xf32, #tpu.memory_space<vmem>>, vector<1x128xf32>
      tpu.vector_store %arg13[%c0_49, %c0_50], %53 {strides = array<i32>} : memref<1x128xf32, #tpu.memory_space<vmem>>, vector<1x128xf32>,
      %c0_51 = arith.constant 0 : index
      %c0_52 = arith.constant 0 : index
      %55 = vector.load %arg14[%c0_51, %c0_52] : memref<1x128xf32, #tpu.memory_space<vmem>>, vector<1x128xf32>
      %56 = arith.addf %55, %23 : vector<1x128xf32>
      %c0_53 = arith.constant 0 : index
      %c0_54 = arith.constant 0 : index
      %57 = vector.load %arg14[%c0_53, %c0_54] : memref<1x128xf32, #tpu.memory_space<vmem>>, vector<1x128xf32>
      tpu.vector_store %arg14[%c0_53, %c0_54], %56 {strides = array<i32>} : memref<1x128xf32, #tpu.memory_space<vmem>>, vector<1x128xf32>,
    } else {
    }
    %c0_19 = arith.constant 0 : index
    %c0_20 = arith.constant 0 : index
    %30 = vector.load %arg11[%c0_19, %c0_20] : memref<1x128xf32, #tpu.memory_space<vmem>>, vector<1x128xf32>
    %c0_21 = arith.constant 0 : index
    %c0_22 = arith.constant 0 : index
    %c0_23 = arith.constant 0 : index
    %31 = vector.load %arg7[%c0_21, %c0_22, %c0_23] : memref<1x1x128xf32, #tpu.memory_space<vmem>>, vector<1x1x128xf32>
    %32 = vector.shape_cast %31 : vector<1x1x128xf32> to vector<1x128xf32>
    %33 = vector.shape_cast %30 : vector<1x128xf32> to vector<1x1x128xf32>
    tpu.vector_store %arg7[%c0_21, %c0_22, %c0_23], %33 {strides = array<i32>} : memref<1x1x128xf32, #tpu.memory_space<vmem>>, vector<1x1x128xf32>,
    %c0_24 = arith.constant 0 : index
    %c0_25 = arith.constant 0 : index
    %34 = vector.load %arg12[%c0_24, %c0_25] : memref<1x128xf32, #tpu.memory_space<vmem>>, vector<1x128xf32>
    %c0_26 = arith.constant 0 : index
    %c0_27 = arith.constant 0 : index
    %c0_28 = arith.constant 0 : index
    %35 = vector.load %arg8[%c0_26, %c0_27, %c0_28] : memref<1x1x128xf32, #tpu.memory_space<vmem>>, vector<1x1x128xf32>
    %36 = vector.shape_cast %35 : vector<1x1x128xf32> to vector<1x128xf32>
    %37 = vector.shape_cast %34 : vector<1x128xf32> to vector<1x1x128xf32>
    tpu.vector_store %arg8[%c0_26, %c0_27, %c0_28], %37 {strides = array<i32>} : memref<1x1x128xf32, #tpu.memory_space<vmem>>, vector<1x1x128xf32>,
    %c0_29 = arith.constant 0 : index
    %c0_30 = arith.constant 0 : index
    %38 = vector.load %arg13[%c0_29, %c0_30] : memref<1x128xf32, #tpu.memory_space<vmem>>, vector<1x128xf32>
    %c0_31 = arith.constant 0 : index
    %c0_32 = arith.constant 0 : index
    %c0_33 = arith.constant 0 : index
    %39 = vector.load %arg9[%c0_31, %c0_32, %c0_33] : memref<1x1x128xf32, #tpu.memory_space<vmem>>, vector<1x1x128xf32>
    %40 = vector.shape_cast %39 : vector<1x1x128xf32> to vector<1x128xf32>
    %41 = vector.shape_cast %38 : vector<1x128xf32> to vector<1x1x128xf32>
    tpu.vector_store %arg9[%c0_31, %c0_32, %c0_33], %41 {strides = array<i32>} : memref<1x1x128xf32, #tpu.memory_space<vmem>>, vector<1x1x128xf32>,
    %c0_34 = arith.constant 0 : index
    %c0_35 = arith.constant 0 : index
    %42 = vector.load %arg14[%c0_34, %c0_35] : memref<1x128xf32, #tpu.memory_space<vmem>>, vector<1x128xf32>
    %c0_36 = arith.constant 0 : index
    %c0_37 = arith.constant 0 : index
    %c0_38 = arith.constant 0 : index
    %43 = vector.load %arg10[%c0_36, %c0_37, %c0_38] : memref<1x1x128xf32, #tpu.memory_space<vmem>>, vector<1x1x128xf32>
    %44 = vector.shape_cast %43 : vector<1x1x128xf32> to vector<1x128xf32>
    %45 = vector.shape_cast %42 : vector<1x128xf32> to vector<1x1x128xf32>
    tpu.vector_store %arg10[%c0_36, %c0_37, %c0_38], %45 {strides = array<i32>} : memref<1x1x128xf32, #tpu.memory_space<vmem>>, vector<1x1x128xf32>,
    return
  }
  func.func @transform_0(%arg0: i32, %arg1: i32) -> (i32, i32, i32) {
    %c0_i32 = arith.constant 0 : i32
    %c0_i32_0 = arith.constant 0 : i32
    return %arg0, %arg1, %c0_i32 : i32, i32, i32
  }
  func.func @transform_1(%arg0: i32, %arg1: i32) -> (i32, i32) {
    %c0_i32 = arith.constant 0 : i32
    %c0_i32_0 = arith.constant 0 : i32
    %c0_i32_1 = arith.constant 0 : i32
    return %c0_i32, %c0_i32_0 : i32, i32
  }
  func.func @transform_2(%arg0: i32, %arg1: i32) -> (i32, i32) {
    %c0_i32 = arith.constant 0 : i32
    %c0_i32_0 = arith.constant 0 : i32
    %c0_i32_1 = arith.constant 0 : i32
    return %c0_i32, %c0_i32_0 : i32, i32
  }
  func.func @transform_3(%arg0: i32, %arg1: i32) -> (i32, i32) {
    %c0_i32 = arith.constant 0 : i32
    %c0_i32_0 = arith.constant 0 : i32
    %c0_i32_1 = arith.constant 0 : i32
    return %c0_i32, %c0_i32_0 : i32, i32
  }
  func.func @transform_4(%arg0: i32, %arg1: i32) -> (i32, i32) {
    %c0_i32 = arith.constant 0 : i32
    %c0_i32_0 = arith.constant 0 : i32
    %c0_i32_1 = arith.constant 0 : i32
    return %c0_i32, %c0_i32_0 : i32, i32
  }
  func.func @transform_5(%arg0: i32, %arg1: i32) -> (i32, i32, i32) {
    %c0_i32 = arith.constant 0 : i32
    %c0_i32_0 = arith.constant 0 : i32
    %c0_i32_1 = arith.constant 0 : i32
    return %arg0, %c0_i32, %c0_i32_0 : i32, i32, i32
  }
  func.func @transform_6(%arg0: i32, %arg1: i32) -> (i32, i32, i32) {
    %c0_i32 = arith.constant 0 : i32
    %c0_i32_0 = arith.constant 0 : i32
    %c0_i32_1 = arith.constant 0 : i32
    return %arg0, %c0_i32, %c0_i32_0 : i32, i32, i32
  }
  func.func @transform_7(%arg0: i32, %arg1: i32) -> (i32, i32, i32) {
    %c0_i32 = arith.constant 0 : i32
    %c0_i32_0 = arith.constant 0 : i32
    %c0_i32_1 = arith.constant 0 : i32
    return %arg0, %c0_i32, %c0_i32_0 : i32, i32, i32
  }
  func.func @transform_8(%arg0: i32, %arg1: i32) -> (i32, i32, i32) {
    %c0_i32 = arith.constant 0 : i32
    %c0_i32_0 = arith.constant 0 : i32
    %c0_i32_1 = arith.constant 0 : i32
    return %arg0, %c0_i32, %c0_i32_0 : i32, i32, i32
  }
}

</mosaic_0001>

<llo_original>
// kernel: tpu_custom_call.1
$region0: #{tpu_custom_call.1}
  #allocation0 [shape = 'u32[]', space=smem, size = 0x4, offset = 0x4, fixed_abs, tag = 'smem constant byte address 0x4 - core index']
  #allocation1 [shape = 'u32[72,128]{1,0:T(1,128)}', space=vmem, size = 0x9000, scoped, tag = 'internal scratch']
  #allocation2 [shape = 'f32[1,128]{1,0:T(1,128)}', space=vmem, size = 0x200, scoped, tag = 'scratch operand']
  #allocation3 [shape = 'f32[1,128]{1,0:T(1,128)}', space=vmem, size = 0x200, scoped, tag = 'scratch operand']
  #allocation4 [shape = 'f32[1,128]{1,0:T(1,128)}', space=vmem, size = 0x200, scoped, tag = 'scratch operand']
  #allocation5 [shape = 'f32[1,128]{1,0:T(1,128)}', space=vmem, size = 0x200, scoped, tag = 'scratch operand']
  %s0 = inlined_call_operand.vmem [shape: bf16[2,64,4], index: 0, kind: input, shape index: {}]
  %s1 = inlined_call_operand.vmem [shape: bf16[4,128], index: 1, kind: input, shape index: {}]
  %s2 = inlined_call_operand.vmem [shape: f32[1,128], index: 2, kind: input, shape index: {}]
  %s3 = inlined_call_operand.vmem [shape: f32[1,128], index: 3, kind: input, shape index: {}]
  %s4 = inlined_call_operand.vmem [shape: bf16[128,128], index: 4, kind: input, shape index: {}]
  %s5 = inlined_call_operand.hbm [shape: f32[2,1,128], index: 5, kind: output, shape index: {0}]
  %s6 = inlined_call_operand.hbm [shape: f32[2,1,128], index: 6, kind: output, shape index: {1}]
  %s7 = inlined_call_operand.hbm [shape: f32[2,1,128], index: 7, kind: output, shape index: {2}]
  %s8 = inlined_call_operand.hbm [shape: f32[2,1,128], index: 8, kind: output, shape index: {3}]
  %9 = xla_tuple %s5, %s6, %s7, %s8
  %s10 = sld [smem:[#allocation0]]
  $region85: #{tpu_custom_call.1} parent=0
    _
  %s12 = ssub.s32 1, %s10
  %s13 = scalar_select 0, %s12, %s10
  $region1: #{tpu_custom_call.1} parent=0
    #allocation6 [shape = 'u8[1024]{0}', space=vmem, size = 0x400, scoped, tag = 'output window, operand 0']
    #allocation7 [shape = 's32[2]{0}', space=sflag, size = 0x8, scoped, tag = 'scoped memory for tpu_custom_call.1']
    #allocation8 [shape = 'u8[1024]{0}', space=vmem, size = 0x400, scoped, tag = 'output window, operand 1']
    #allocation9 [shape = 's32[2]{0}', space=sflag, size = 0x8, scoped, tag = 'scoped memory for tpu_custom_call.1']
    #allocation10 [shape = 'u8[1024]{0}', space=vmem, size = 0x400, scoped, tag = 'output window, operand 2']
    #allocation11 [shape = 'u8[1024]{0}', space=vmem, size = 0x400, scoped, tag = 'output window, operand 3']
    #allocation12 [shape = 's32[2]{0}', space=sflag, size = 0x8, scoped, tag = 'scoped memory for tpu_custom_call.1']
    %14 = vsyncpa [#allocation7], 0
    %s15 = scalar_lea.sflag [#allocation7], 1
    %16 = vsyncpa %s15, 0
    %17 = vsyncpa [#allocation9], 0
    %s18 = scalar_lea.sflag [#allocation9], 1
    %19 = vsyncpa %s18, 0
    %20 = vsyncpa [#allocation12], 0
    %s21 = scalar_lea.sflag [#allocation12], 1
    %22 = vsyncpa %s21, 0
    loop: start=0, step=1, limit=10
    $region2: #{tpu_custom_call.1} parent=1 // loop_pre_header
      _
    $region3: #{tpu_custom_call.1} parent=1 // loop_header
      %s24 = sphi 0, %s28
      %p25 = scmp.ge.s32.totalorder %s24, 10
      %s31 = sphi 0, %s43
      %s32 = sphi 0, %s39
      %s33 = sphi 0, %s31
      %s34 = sphi 0, %s32
      %s35 = sphi 0, %s33
      %s36 = sphi 0, %s34
      %s48 = sphi 0, %s50
      %s51 = sphi 0, %s48
      %s52 = sphi 0, %s51
      %s68 = sphi 0, %s52
      %s72 = sphi 0, %s72
      %s74 = sphi 0, %s72
      %s75 = sphi 0, %s74
      %s89 = sphi 0, %s75
      %s93 = sphi 0, %s93
      %s95 = sphi 0, %s93
      %s96 = sphi 0, %s95
      %s110 = sphi 0, %s96
      %s114 = sphi 0, %s114
      %s116 = sphi 0, %s114
      %s117 = sphi 0, %s116
      %s131 = sphi 0, %s117
      %s135 = sphi 0, %s135
      %s137 = sphi 0, %s135
      %s138 = sphi 0, %s137
      %s152 = sphi 0, %s138
      %s158 = sphi 0, %s160
      %s161 = sphi 0, %s158
      %s162 = sphi 0, %s161
      %s178 = sphi 0, %s162
      %s184 = sphi 0, %s186
      %s187 = sphi 0, %s184
      %s188 = sphi 0, %s187
      %s204 = sphi 0, %s188
      %s210 = sphi 0, %s212
      %s213 = sphi 0, %s210
      %s214 = sphi 0, %s213
      %s230 = sphi 0, %s214
      %s236 = sphi 0, %s238
      %s239 = sphi 0, %s236
      %s240 = sphi 0, %s239
      %s256 = sphi 0, %s240
    $region4: #{tpu_custom_call.1} parent=1 // loop_header_branch
      %27 = sbr.rel (%p25) target = $region8
    $region5: #{tpu_custom_call.1} parent=1 // loop_body
      %s29 = ssub.s32 %s24, 1
      %s30 = ssub.s32 %s24, 2
      %s37 = sadd.s32 1, %s32
      %p38 = scmp.ge.s32.totalorder %s37, 4
      %s39 = scalar_select %p38, 0, %s37
      %s40 = sadd.s32 1, %s31
      %s41 = scalar_select %p38, %s40, %s31
      %p42 = scmp.ge.s32.totalorder %s41, 2
      %s43 = scalar_select %p42, 0, %s41
      %s44 = ssub.s32 %s31, %s43
      %s45 = ssub.s32 %s32, %s39
      %s46 = sor.u32 %s44, %s45
      %p47 = scmp.eq.s32.totalorder %s46, 0
      %s49 = sadd.s32 %s48, 1
      %s50 = scalar_select %p47, %s48, %s49
      %p53 = pneg %p47
      %p54 = scmp.eq.s32.totalorder %s24, 7
      %p55 = por %p53, %p54
      %p56 = scmp.ne.s32.totalorder %s48, %s51
      %p57 = scmp.eq.s32.totalorder %s24, 0
      %p58 = por %p56, %p57
      %p59 = scmp.ne.s32.totalorder %s48, %s51
      %p60 = scmp.eq.s32.totalorder %s29, 7
      %p61 = por %p59, %p60
      %p62 = scmp.ne.s32.totalorder %s51, %s52
      %p63 = scmp.eq.s32.totalorder %s29, 0
      %p64 = por %p62, %p63
      %p65 = scmp.ne.s32.totalorder %s51, %s52
      %p66 = scmp.eq.s32.totalorder %s30, 7
      %p67 = por %p65, %p66
      %p69 = scmp.ne.s32.totalorder %s52, %s68
      %p70 = scmp.eq.s32.totalorder %s30, 0
      %p71 = por %p69, %p70
      %s73 = sadd.s32 %s72, 1
      %p76 = scmp.eq.s32.totalorder %s24, 7
      %p77 = scmp.ne.s32.totalorder %s72, %s74
      %p78 = scmp.eq.s32.totalorder %s24, 0
      %p79 = por %p77, %p78
      %p80 = scmp.ne.s32.totalorder %s72, %s74
      %p81 = scmp.eq.s32.totalorder %s29, 7
      %p82 = por %p80, %p81
      %p83 = scmp.ne.s32.totalorder %s74, %s75
      %p84 = scmp.eq.s32.totalorder %s29, 0
      %p85 = por %p83, %p84
      %p86 = scmp.ne.s32.totalorder %s74, %s75
      %p87 = scmp.eq.s32.totalorder %s30, 7
      %p88 = por %p86, %p87
      %p90 = scmp.ne.s32.totalorder %s75, %s89
      %p91 = scmp.eq.s32.totalorder %s30, 0
      %p92 = por %p90, %p91
      %s94 = sadd.s32 %s93, 1
      %p97 = scmp.eq.s32.totalorder %s24, 7
      %p98 = scmp.ne.s32.totalorder %s93, %s95
      %p99 = scmp.eq.s32.totalorder %s24, 0
      %p100 = por %p98, %p99
      %p101 = scmp.ne.s32.totalorder %s93, %s95
      %p102 = scmp.eq.s32.totalorder %s29, 7
      %p103 = por %p101, %p102
      %p104 = scmp.ne.s32.totalorder %s95, %s96
      %p105 = scmp.eq.s32.totalorder %s29, 0
      %p106 = por %p104, %p105
      %p107 = scmp.ne.s32.totalorder %s95, %s96
      %p108 = scmp.eq.s32.totalorder %s30, 7
      %p109 = por %p107, %p108
      %p111 = scmp.ne.s32.totalorder %s96, %s110
      %p112 = scmp.eq.s32.totalorder %s30, 0
      %p113 = por %p111, %p112
      %s115 = sadd.s32 %s114, 1
      %p118 = scmp.eq.s32.totalorder %s24, 7
      %p119 = scmp.ne.s32.totalorder %s114, %s116
      %p120 = scmp.eq.s32.totalorder %s24, 0
      %p121 = por %p119, %p120
      %p122 = scmp.ne.s32.totalorder %s114, %s116
      %p123 = scmp.eq.s32.totalorder %s29, 7
      %p124 = por %p122, %p123
      %p125 = scmp.ne.s32.totalorder %s116, %s117
      %p126 = scmp.eq.s32.totalorder %s29, 0
      %p127 = por %p125, %p126
      %p128 = scmp.ne.s32.totalorder %s116, %s117
      %p129 = scmp.eq.s32.totalorder %s30, 7
      %p130 = por %p128, %p129
      %p132 = scmp.ne.s32.totalorder %s117, %s131
      %p133 = scmp.eq.s32.totalorder %s30, 0
      %p134 = por %p132, %p133
      %s136 = sadd.s32 %s135, 1
      %p139 = scmp.eq.s32.totalorder %s24, 7
      %p140 = scmp.ne.s32.totalorder %s135, %s137
      %p141 = scmp.eq.s32.totalorder %s24, 0
      %p142 = por %p140, %p141
      %p143 = scmp.ne.s32.totalorder %s135, %s137
      %p144 = scmp.eq.s32.totalorder %s29, 7
      %p145 = por %p143, %p144
      %p146 = scmp.ne.s32.totalorder %s137, %s138
      %p147 = scmp.eq.s32.totalorder %s29, 0
      %p148 = por %p146, %p147
      %p149 = scmp.ne.s32.totalorder %s137, %s138
      %p150 = scmp.eq.s32.totalorder %s30, 7
      %p151 = por %p149, %p150
      %p153 = scmp.ne.s32.totalorder %s138, %s152
      %p154 = scmp.eq.s32.totalorder %s30, 0
      %p155 = por %p153, %p154
      %s156 = ssub.s32 %s31, %s43
      %p157 = scmp.eq.s32.totalorder %s156, 0
      %s159 = sadd.s32 %s158, 1
      %s160 = scalar_select %p157, %s158, %s159
      %p163 = pneg %p157
      %p164 = scmp.eq.s32.totalorder %s24, 7
      %p165 = por %p163, %p164
      %p166 = scmp.ne.s32.totalorder %s158, %s161
      %p167 = scmp.eq.s32.totalorder %s24, 0
      %p168 = por %p166, %p167
      %p169 = scmp.ne.s32.totalorder %s158, %s161
      %p170 = scmp.eq.s32.totalorder %s29, 7
      %p171 = por %p169, %p170
      %p172 = scmp.ne.s32.totalorder %s161, %s162
      %p173 = scmp.eq.s32.totalorder %s29, 0
      %p174 = por %p172, %p173
      %p175 = scmp.ne.s32.totalorder %s161, %s162
      %p176 = scmp.eq.s32.totalorder %s30, 7
      %p177 = por %p175, %p176
      %p179 = scmp.ne.s32.totalorder %s162, %s178
      %p180 = scmp.eq.s32.totalorder %s30, 0
      %p181 = por %p179, %p180
      %s182 = ssub.s32 %s31, %s43
      %p183 = scmp.eq.s32.totalorder %s182, 0
      %s185 = sadd.s32 %s184, 1
      %s186 = scalar_select %p183, %s184, %s185
      %p189 = pneg %p183
      %p190 = scmp.eq.s32.totalorder %s24, 7
      %p191 = por %p189, %p190
      %p192 = scmp.ne.s32.totalorder %s184, %s187
      %p193 = scmp.eq.s32.totalorder %s24, 0
      %p194 = por %p192, %p193
      %p195 = scmp.ne.s32.totalorder %s184, %s187
      %p196 = scmp.eq.s32.totalorder %s29, 7
      %p197 = por %p195, %p196
      %p198 = scmp.ne.s32.totalorder %s187, %s188
      %p199 = scmp.eq.s32.totalorder %s29, 0
      %p200 = por %p198, %p199
      %p201 = scmp.ne.s32.totalorder %s187, %s188
      %p202 = scmp.eq.s32.totalorder %s30, 7
      %p203 = por %p201, %p202
      %p205 = scmp.ne.s32.totalorder %s188, %s204
      %p206 = scmp.eq.s32.totalorder %s30, 0
      %p207 = por %p205, %p206
      %s208 = ssub.s32 %s31, %s43
      %p209 = scmp.eq.s32.totalorder %s208, 0
      %s211 = sadd.s32 %s210, 1
      %s212 = scalar_select %p209, %s210, %s211
      %p215 = pneg %p209
      %p216 = scmp.eq.s32.totalorder %s24, 7
      %p217 = por %p215, %p216
      %p218 = scmp.ne.s32.totalorder %s210, %s213
      %p219 = scmp.eq.s32.totalorder %s24, 0
      %p220 = por %p218, %p219
      %p221 = scmp.ne.s32.totalorder %s210, %s213
      %p222 = scmp.eq.s32.totalorder %s29, 7
      %p223 = por %p221, %p222
      %p224 = scmp.ne.s32.totalorder %s213, %s214
      %p225 = scmp.eq.s32.totalorder %s29, 0
      %p226 = por %p224, %p225
      %p227 = scmp.ne.s32.totalorder %s213, %s214
      %p228 = scmp.eq.s32.totalorder %s30, 7
      %p229 = por %p227, %p228
      %p231 = scmp.ne.s32.totalorder %s214, %s230
      %p232 = scmp.eq.s32.totalorder %s30, 0
      %p233 = por %p231, %p232
      %s234 = ssub.s32 %s31, %s43
      %p235 = scmp.eq.s32.totalorder %s234, 0
      %s237 = sadd.s32 %s236, 1
      %s238 = scalar_select %p235, %s236, %s237
      %p241 = pneg %p235
      %p242 = scmp.eq.s32.totalorder %s24, 7
      %p243 = por %p241, %p242
      %p244 = scmp.ne.s32.totalorder %s236, %s239
      %p245 = scmp.eq.s32.totalorder %s24, 0
      %p246 = por %p244, %p245
      %p247 = scmp.ne.s32.totalorder %s236, %s239
      %p248 = scmp.eq.s32.totalorder %s29, 7
      %p249 = por %p247, %p248
      %p250 = scmp.ne.s32.totalorder %s239, %s240
      %p251 = scmp.eq.s32.totalorder %s29, 0
      %p252 = por %p250, %p251
      %p253 = scmp.ne.s32.totalorder %s239, %s240
      %p254 = scmp.eq.s32.totalorder %s30, 7
      %p255 = por %p253, %p254
      %p257 = scmp.ne.s32.totalorder %s240, %s256
      %p258 = scmp.eq.s32.totalorder %s30, 0
      %p259 = por %p257, %p258
      %p260 = scmp.le.s32.totalorder 1, %s24
      %p261 = scmp.lt.s32.totalorder %s24, 9
      %p262 = pnand %p260, %p261
      %p263 = pneg %p262
      // Predicated region
      $region9: #{tpu_custom_call.1} parent=5 // pred_check
        _
      $region10: #{tpu_custom_call.1} parent=5 // pred_check_branch
        %265 = sbr.rel (%p262) target = $region12
      $region11: #{tpu_custom_call.1} parent=5 // pred_region
        %s266 = ssub.s32 %s24, 1
        // Predicated region
        $region13: #{tpu_custom_call.1} parent=11 // pred_check
          %p267 = pneg %p85
        $region14: #{tpu_custom_call.1} parent=11 // pred_check_branch
          %269 = sbr.rel (%p267) target = $region16
        $region15: #{tpu_custom_call.1} parent=11 // pred_region
          _
        $region16: #{tpu_custom_call.1} parent=11 // pred_fallthru
          _
        // Predicated region
        $region17: #{tpu_custom_call.1} parent=11 // pred_check
          %p270 = pneg %p106
        $region18: #{tpu_custom_call.1} parent=11 // pred_check_branch
          %272 = sbr.rel (%p270) target = $region20
        $region19: #{tpu_custom_call.1} parent=11 // pred_region
          _
        $region20: #{tpu_custom_call.1} parent=11 // pred_fallthru
          _
        // Predicated region
        $region21: #{tpu_custom_call.1} parent=11 // pred_check
          %p273 = pneg %p127
        $region22: #{tpu_custom_call.1} parent=11 // pred_check_branch
          %275 = sbr.rel (%p273) target = $region24
        $region23: #{tpu_custom_call.1} parent=11 // pred_region
          _
        $region24: #{tpu_custom_call.1} parent=11 // pred_fallthru
          _
        // Predicated region
        $region25: #{tpu_custom_call.1} parent=11 // pred_check
          %p276 = pneg %p148
        $region26: #{tpu_custom_call.1} parent=11 // pred_check_branch
          %278 = sbr.rel (%p276) target = $region28
        $region27: #{tpu_custom_call.1} parent=11 // pred_region
          _
        $region28: #{tpu_custom_call.1} parent=11 // pred_fallthru
          _
      $region12: #{tpu_custom_call.1} parent=5 // pred_fallthru
        _
      %p279 = scmp.lt.s32.totalorder %s24, 8
      // Predicated region
      $region29: #{tpu_custom_call.1} parent=5 // pred_check
        %p280 = pneg %p279
      $region30: #{tpu_custom_call.1} parent=5 // pred_check_branch
        %282 = sbr.rel (%p280) target = $region32
      $region31: #{tpu_custom_call.1} parent=5 // pred_region
        // Predicated region
        $region33: #{tpu_custom_call.1} parent=31 // pred_check
          %p283 = pneg %p58
        $region34: #{tpu_custom_call.1} parent=31 // pred_check_branch
          %285 = sbr.rel (%p283) target = $region36
        $region35: #{tpu_custom_call.1} parent=31 // pred_region
          %s286 = smul.u32 2, %s32
          %p287 = scmp.lt.s32.totalorder %s31, 1
          %s288 = scalar_select %p287, %s31, 1
          %p289 = scmp.lt.s32.totalorder %s286, 7
          %s290 = scalar_select %p289, %s286, 7
          %s291 = smul.addr %s288, 8
          %s292 = sadd.s32 %s290, %s291
          %s293 = smul.addr %s292, 4
          %s294 = scalar_lea.vmem %s0, %s293
          %s295 = smul.u32 2, %s32
        $region36: #{tpu_custom_call.1} parent=31 // pred_fallthru
          _
      $region32: #{tpu_custom_call.1} parent=5 // pred_fallthru
        _
      %p296 = scmp.le.s32.totalorder 1, %s24
      %p297 = scmp.lt.s32.totalorder %s24, 9
      %p298 = pnand %p296, %p297
      %p299 = pneg %p298
      // Predicated region
      $region37: #{tpu_custom_call.1} parent=5 // pred_check
        _
      $region38: #{tpu_custom_call.1} parent=5 // pred_check_branch
        %301 = sbr.rel (%p298) target = $region40
      $region39: #{tpu_custom_call.1} parent=5 // pred_region
        %s302 = ssub.s32 %s24, 1
        %s303 = smul.u32 2, %s34
        %p304 = scmp.lt.s32.totalorder %s33, 1
        %s305 = scalar_select %p304, %s33, 1
        %p306 = scmp.lt.s32.totalorder %s303, 7
        %s307 = scalar_select %p306, %s303, 7
        %s308 = smul.addr %s305, 8
        %s309 = sadd.s32 %s307, %s308
        %s310 = smul.addr %s309, 4
        %s311 = scalar_lea.vmem %s0, %s310
        %p312 = pneg %p64
        %p313 = pneg %p61
        %p314 = pneg %p85
        %p315 = pneg %p82
        %p316 = pneg %p106
        %p317 = pneg %p103
        %p318 = pneg %p127
        %p319 = pneg %p124
        %p320 = pneg %p148
        %p321 = pneg %p145
        %p322 = pneg %p174
        %p323 = pneg %p171
        %s324 = sand.u32 %s161, 1
        %s325 = scalar_lea.sflag [#allocation7], %s324
        %s326 = sand.u32 %s161, 1
        %s327 = scalar_lea.vmem [#allocation6], %s326
        %p328 = pneg %p200
        %p329 = pneg %p197
        %s330 = sand.u32 %s29, 1
        %s331 = scalar_lea.sflag [#allocation9], %s330
        %s332 = sand.u32 %s187, 1
        %s333 = scalar_lea.vmem [#allocation8], %s332
        %p334 = pneg %p226
        %p335 = pneg %p223
        %s336 = sand.u32 %s29, 1
        %s337 = scalar_lea.sflag [#allocation9], %s336
        %s338 = sand.u32 %s213, 1
        %s339 = scalar_lea.vmem [#allocation10], %s338
        %p340 = pneg %p252
        %p341 = pneg %p249
        %s342 = sand.u32 %s239, 1
        %s343 = scalar_lea.sflag [#allocation12], %s342
        %s344 = sand.u32 %s239, 1
        %s345 = scalar_lea.vmem [#allocation11], %s344
        %s346 = smul.u32 2, %s34
        %p347 = scmp.lt.s32.totalorder %s33, 1
        %s348 = scalar_select %p347, %s33, 1
        %p349 = scmp.lt.s32.totalorder %s346, 7
        %s350 = scalar_select %p349, %s346, 7
        %s351 = smul.addr %s348, 8
        %s352 = sadd.s32 %s350, %s351
        %s353 = smul.addr %s352, 4
        %s354 = scalar_lea.vmem %s0, %s353
        %s355 = smul.u32 2, %s34
        %v357 = vld [vmem:[%s354] sm:$0xf]
        %v358 = vld [vmem:[%s354 + $0x4] sm:$0xf]
        %v359 = vld [vmem:[%s1] sm:$0x3]
        %v362 = vunpack.c.l.b16 %v357
        %v363 = vunpack.c.l.b16 %v358
        %v364 = vpack.c.b16 %v363, %v362
        %vm365 = vcmask 31744
        %v367 = vsel %vm365, %v364, 0
        %vm369 = vcmask 1041408
        %v371 = vsel %vm369, %v359, 0
        %373 = vmatpush.bf16.msra.mxu0 0
        %374 = vmatpush.bf16.msra.mxu0 0
        %375 = vmatpush.bf16.msra.mxu0 0
        %376 = vmatpush.bf16.msra.mxu0 0
        %377 = vmatpush.bf16.msra.mxu0 0
        %378 = vmatpush.bf16.msra.mxu0 0
        %379 = vmatpush.bf16.msra.mxu0 0
        %380 = vmatpush.bf16.msra.mxu0 %v371
        %381 = vmatmul.bf16.gmra.mxu0 %v367
        %v382 = vpop.f32.mrf.mxu0
        %v383 = vadd.f32 0.0, %v382
        %v384 = vpop.f32.mrf.mxu0
        %v385 = vadd.f32 0.0, %v384
        %386 = vdwg.mxu0
        %v387 = vld [vmem:[%s2] sm:$0x1]
        %v389 = vperm.slane %v387, 0
        %v391 = vmul.f32 %v383, %v389
        %v392 = vmul.f32 %v385, %v389
        %v393 = vld [vmem:[%s3] sm:$0x1]
        %v395 = vperm.slane %v393, 0
        %v397 = vadd.f32 %v391, %v395
        %v398 = vadd.f32 %v392, %v395
        %v399 = vmax.f32 %v397, 0.0
        %v400 = vmax.f32 %v398, 0.0
        %v401 = vpack.c.bf16 %v400, %v399
        %v402 = vld [vmem:[%s4] sm:$0xf]
        %v403 = vld [vmem:[%s4 + $0x4] sm:$0xf]
        %v404 = vld [vmem:[%s4 + $0x8] sm:$0xf]
        %v405 = vld [vmem:[%s4 + $0xc] sm:$0xf]
        %v406 = vld [vmem:[%s4 + $0x10] sm:$0xf]
        %v407 = vld [vmem:[%s4 + $0x14] sm:$0xf]
        %v408 = vld [vmem:[%s4 + $0x18] sm:$0xf]
        %v409 = vld [vmem:[%s4 + $0x1c] sm:$0xf]
        %v410 = vld [vmem:[%s4 + $0x20] sm:$0xf]
        %v411 = vld [vmem:[%s4 + $0x24] sm:$0xf]
        %v412 = vld [vmem:[%s4 + $0x28] sm:$0xf]
        %v413 = vld [vmem:[%s4 + $0x2c] sm:$0xf]
        %v414 = vld [vmem:[%s4 + $0x30] sm:$0xf]
        %v415 = vld [vmem:[%s4 + $0x34] sm:$0xf]
        %v416 = vld [vmem:[%s4 + $0x38] sm:$0xf]
        %v417 = vld [vmem:[%s4 + $0x3c] sm:$0xf]
        %v434 = vunpack.c.l.b16 %v402
        %v435 = vunpack.c.l.b16 %v403
        %v436 = vunpack.c.l.b16 %v404
        %v437 = vunpack.c.l.b16 %v405
        %v438 = vunpack.c.l.b16 %v406
        %v439 = vunpack.c.l.b16 %v407
        %v440 = vunpack.c.l.b16 %v408
        %v441 = vunpack.c.l.b16 %v409
        %v442 = vunpack.c.l.b16 %v410
        %v443 = vunpack.c.l.b16 %v411
        %v444 = vunpack.c.l.b16 %v412
        %v445 = vunpack.c.l.b16 %v413
        %v446 = vunpack.c.l.b16 %v414
        %v447 = vunpack.c.l.b16 %v415
        %v448 = vunpack.c.l.b16 %v416
        %v449 = vunpack.c.l.b16 %v417
        %v450 = vpack.c.b16 %v435, %v434
        %v451 = vpack.c.b16 %v437, %v436
        %v452 = vpack.c.b16 %v439, %v438
        %v453 = vpack.c.b16 %v441, %v440
        %v454 = vpack.c.b16 %v443, %v442
        %v455 = vpack.c.b16 %v445, %v444
        %v456 = vpack.c.b16 %v447, %v446
        %v457 = vpack.c.b16 %v449, %v448
        %466 = vmatpush.bf16.msra.mxu0 %v457
        %467 = vmatpush.bf16.msra.mxu0 %v456
        %468 = vmatpush.bf16.msra.mxu0 %v455
        %469 = vmatpush.bf16.msra.mxu0 %v454
        %470 = vmatpush.bf16.msra.mxu0 %v453
        %471 = vmatpush.bf16.msra.mxu0 %v452
        %472 = vmatpush.bf16.msra.mxu0 %v451
        %473 = vmatpush.bf16.msra.mxu0 %v450
        %474 = vmatmul.bf16.gmra.mxu0 %v401
        %v475 = vpop.f32.mrf.mxu0
        %v476 = vadd.f32 0.0, %v475
        %v477 = vpop.f32.mrf.mxu0
        %v478 = vadd.f32 0.0, %v477
        %479 = vdwg.mxu0
        %v480 = vmax.f32 %v476, %v478
        %v481 = vrot.slane %v480, 4
        %v482 = vmax.f32 %v480, %v481
        %v483 = vrot.slane %v482, 2
        %v484 = vmax.f32 %v482, %v483
        %v485 = vrot.slane %v484, 1
        %v486 = vmax.f32 %v484, %v485
        %v487 = vmin.f32 %v476, %v478
        %v488 = vrot.slane %v487, 4
        %v489 = vmin.f32 %v487, %v488
        %v490 = vrot.slane %v489, 2
        %v491 = vmin.f32 %v489, %v490
        %v492 = vrot.slane %v491, 1
        %v493 = vmin.f32 %v491, %v492
        %v494 = vadd.f32 %v476, %v478
        %v495 = vrot.slane %v494, 4
        %v496 = vadd.f32 %v494, %v495
        %v497 = vrot.slane %v496, 2
        %v498 = vadd.f32 %v496, %v497
        %v499 = vrot.slane %v498, 1
        %v500 = vadd.f32 %v498, %v499
        %v501 = vmul.f32 %v476, %v476
        %v502 = vmul.f32 %v478, %v478
        %v503 = vadd.f32 %v501, %v502
        %v504 = vrot.slane %v503, 4
        %v505 = vadd.f32 %v503, %v504
        %v506 = vrot.slane %v505, 2
        %v507 = vadd.f32 %v505, %v506
        %v508 = vrot.slane %v507, 1
        %v509 = vadd.f32 %v507, %v508
        %p510 = scmp.eq.s32.totalorder %s34, 0
        // Predicated region
        $region41: #{tpu_custom_call.1} parent=39 // pred_check
          %p511 = pneg %p510
        $region42: #{tpu_custom_call.1} parent=39 // pred_check_branch
          %513 = sbr.rel (%p511) target = $region44
        $region43: #{tpu_custom_call.1} parent=39 // pred_region
          %514 = vst [vmem:[#allocation2] sm:$0x1] %v486
          %515 = vst [vmem:[#allocation3] sm:$0x1] %v493
          %516 = vst [vmem:[#allocation4] sm:$0x1] %v500
          %517 = vst [vmem:[#allocation5] sm:$0x1] %v509
        $region44: #{tpu_custom_call.1} parent=39 // pred_fallthru
          _
        %p518 = scmp.ne.s32.totalorder %s34, 0
        // Predicated region
        $region45: #{tpu_custom_call.1} parent=39 // pred_check
          %p519 = pneg %p518
        $region46: #{tpu_custom_call.1} parent=39 // pred_check_branch
          %521 = sbr.rel (%p519) target = $region48
        $region47: #{tpu_custom_call.1} parent=39 // pred_region
          %v522 = vld [vmem:[#allocation2] sm:$0x1]
          %v523 = vmax.f32 %v522, %v486
          %524 = vst [vmem:[#allocation2] sm:$0x1] %v523
          %v525 = vld [vmem:[#allocation3] sm:$0x1]
          %v526 = vmin.f32 %v525, %v493
          %527 = vst [vmem:[#allocation3] sm:$0x1] %v526
          %v528 = vld [vmem:[#allocation4] sm:$0x1]
          %v529 = vadd.f32 %v528, %v500
          %530 = vst [vmem:[#allocation4] sm:$0x1] %v529
          %v531 = vld [vmem:[#allocation5] sm:$0x1]
          %v532 = vadd.f32 %v531, %v509
          %533 = vst [vmem:[#allocation5] sm:$0x1] %v532
        $region48: #{tpu_custom_call.1} parent=39 // pred_fallthru
          _
        %v534 = vld [vmem:[#allocation2] sm:$0x1]
        %535 = vst [vmem:[%s327] sm:$0x1] %v534
        %v536 = vld [vmem:[#allocation3] sm:$0x1]
        %537 = vst [vmem:[%s333] sm:$0x1] %v536
        %v538 = vld [vmem:[#allocation4] sm:$0x1]
        %539 = vst [vmem:[%s339] sm:$0x1] %v538
        %v540 = vld [vmem:[#allocation5] sm:$0x1]
        %541 = vst [vmem:[%s345] sm:$0x1] %v540
        %s542 = sand.u32 %s161, 1
        %s543 = scalar_lea.sflag [#allocation7], %s542
        %s544 = sand.u32 %s161, 1
        %s545 = scalar_lea.vmem [#allocation6], %s544
        %s546 = sand.u32 %s29, 1
        %s547 = scalar_lea.sflag [#allocation9], %s546
        %s548 = sand.u32 %s187, 1
        %s549 = scalar_lea.vmem [#allocation8], %s548
        %s550 = sand.u32 %s29, 1
        %s551 = scalar_lea.sflag [#allocation9], %s550
        %s552 = sand.u32 %s213, 1
        %s553 = scalar_lea.vmem [#allocation10], %s552
        %s554 = sand.u32 %s239, 1
        %s555 = scalar_lea.sflag [#allocation12], %s554
        %s556 = sand.u32 %s239, 1
        %s557 = scalar_lea.vmem [#allocation11], %s556
        // Predicated region
        $region49: #{tpu_custom_call.1} parent=39 // pred_check
          %p558 = pneg %p171
        $region50: #{tpu_custom_call.1} parent=39 // pred_check_branch
          %560 = sbr.rel (%p558) target = $region52
        $region51: #{tpu_custom_call.1} parent=39 // pred_region
          %562 = vsyncadd %s543, 0
          %s563 = scalar_lea.hbm %s5, %s33
          %s565 = sshll.u32 %s545, 4
          %s566 = int_to_ptr.vmem [resolvable:$true] %s565
          %s567 = sshll.u32 %s563, 4
          %s568 = int_to_ptr.hbm [resolvable:$true] %s567
          %570 = dma.vmem_to_hbm [thread:$0]  %s566, 16, %s568, %s543
        $region52: #{tpu_custom_call.1} parent=39 // pred_fallthru
          _
        // Predicated region
        $region53: #{tpu_custom_call.1} parent=39 // pred_check
          %p571 = pneg %p197
        $region54: #{tpu_custom_call.1} parent=39 // pred_check_branch
          %573 = sbr.rel (%p571) target = $region56
        $region55: #{tpu_custom_call.1} parent=39 // pred_region
          %575 = vsyncadd %s547, 0
          %s576 = scalar_lea.hbm %s6, %s33
          %s578 = sshll.u32 %s549, 4
          %s579 = int_to_ptr.vmem [resolvable:$true] %s578
          %s580 = sshll.u32 %s576, 4
          %s581 = int_to_ptr.hbm [resolvable:$true] %s580
          %583 = dma.vmem_to_hbm [thread:$0]  %s579, 16, %s581, %s547
        $region56: #{tpu_custom_call.1} parent=39 // pred_fallthru
          _
        // Predicated region
        $region57: #{tpu_custom_call.1} parent=39 // pred_check
          %p584 = pneg %p223
        $region58: #{tpu_custom_call.1} parent=39 // pred_check_branch
          %586 = sbr.rel (%p584) target = $region60
        $region59: #{tpu_custom_call.1} parent=39 // pred_region
          %588 = vsyncadd %s551, 0
          %s589 = scalar_lea.hbm %s7, %s33
          %s591 = sshll.u32 %s553, 4
          %s592 = int_to_ptr.vmem [resolvable:$true] %s591
          %s593 = sshll.u32 %s589, 4
          %s594 = int_to_ptr.hbm [resolvable:$true] %s593
          %596 = dma.vmem_to_hbm [thread:$0]  %s592, 16, %s594, %s551
        $region60: #{tpu_custom_call.1} parent=39 // pred_fallthru
          _
        // Predicated region
        $region61: #{tpu_custom_call.1} parent=39 // pred_check
          %p597 = pneg %p249
        $region62: #{tpu_custom_call.1} parent=39 // pred_check_branch
          %599 = sbr.rel (%p597) target = $region64
        $region63: #{tpu_custom_call.1} parent=39 // pred_region
          %601 = vsyncadd %s555, 0
          %s602 = scalar_lea.hbm %s8, %s33
          %s604 = sshll.u32 %s557, 4
          %s605 = int_to_ptr.vmem [resolvable:$true] %s604
          %s606 = sshll.u32 %s602, 4
          %s607 = int_to_ptr.hbm [resolvable:$true] %s606
          %609 = dma.vmem_to_hbm [thread:$0]  %s605, 16, %s607, %s555
        $region64: #{tpu_custom_call.1} parent=39 // pred_fallthru
          _
      $region40: #{tpu_custom_call.1} parent=5 // pred_fallthru
        _
      %p610 = scmp.le.s32.totalorder 2, %s24
      // Predicated region
      $region65: #{tpu_custom_call.1} parent=5 // pred_check
        %p611 = pneg %p610
      $region66: #{tpu_custom_call.1} parent=5 // pred_check_branch
        %613 = sbr.rel (%p611) target = $region68
      $region67: #{tpu_custom_call.1} parent=5 // pred_region
        %s614 = ssub.s32 %s24, 2
        // Predicated region
        $region69: #{tpu_custom_call.1} parent=67 // pred_check
          %p615 = pneg %p177
        $region70: #{tpu_custom_call.1} parent=67 // pred_check_branch
          %617 = sbr.rel (%p615) target = $region72
        $region71: #{tpu_custom_call.1} parent=67 // pred_region
          %s618 = sand.u32 %s162, 1
          %s619 = scalar_lea.sflag [#allocation7], %s618
          %s620 = sand.u32 %s162, 1
          %s621 = scalar_lea.vmem [#allocation6], %s620
          %623 = dma.done %s619, 16
        $region72: #{tpu_custom_call.1} parent=67 // pred_fallthru
          _
        // Predicated region
        $region73: #{tpu_custom_call.1} parent=67 // pred_check
          %p624 = pneg %p203
        $region74: #{tpu_custom_call.1} parent=67 // pred_check_branch
          %626 = sbr.rel (%p624) target = $region76
        $region75: #{tpu_custom_call.1} parent=67 // pred_region
          %s627 = sand.u32 %s30, 1
          %s628 = scalar_lea.sflag [#allocation9], %s627
          %s629 = sand.u32 %s188, 1
          %s630 = scalar_lea.vmem [#allocation8], %s629
          %632 = dma.done %s628, 16
        $region76: #{tpu_custom_call.1} parent=67 // pred_fallthru
          _
        // Predicated region
        $region77: #{tpu_custom_call.1} parent=67 // pred_check
          %p633 = pneg %p229
        $region78: #{tpu_custom_call.1} parent=67 // pred_check_branch
          %635 = sbr.rel (%p633) target = $region80
        $region79: #{tpu_custom_call.1} parent=67 // pred_region
          %s636 = sand.u32 %s30, 1
          %s637 = scalar_lea.sflag [#allocation9], %s636
          %s638 = sand.u32 %s214, 1
          %s639 = scalar_lea.vmem [#allocation10], %s638
          %641 = dma.done %s637, 16
        $region80: #{tpu_custom_call.1} parent=67 // pred_fallthru
          _
        // Predicated region
        $region81: #{tpu_custom_call.1} parent=67 // pred_check
          %p642 = pneg %p255
        $region82: #{tpu_custom_call.1} parent=67 // pred_check_branch
          %644 = sbr.rel (%p642) target = $region84
        $region83: #{tpu_custom_call.1} parent=67 // pred_region
          %s645 = sand.u32 %s240, 1
          %s646 = scalar_lea.sflag [#allocation12], %s645
          %s647 = sand.u32 %s240, 1
          %s648 = scalar_lea.vmem [#allocation11], %s647
          %650 = dma.done %s646, 16
        $region84: #{tpu_custom_call.1} parent=67 // pred_fallthru
          _
      $region68: #{tpu_custom_call.1} parent=5 // pred_fallthru
        _
    $region6: #{tpu_custom_call.1} parent=1 // loop_footer
      %s28 = sadd.s32 1, %s24
    $region7: #{tpu_custom_call.1} parent=1 // loop_footer_branch
      %23 = sbr.rel target = $region3
    $region8: #{tpu_custom_call.1} parent=1 // loop_exit
      _
    %651 = vsyncpa [#allocation7], 1
    %s652 = scalar_lea.sflag [#allocation7], 1
    %653 = vsyncpa %s652, 1
    %654 = vsyncpa [#allocation9], 1
    %s655 = scalar_lea.sflag [#allocation9], 1
    %656 = vsyncpa %s655, 1
    %657 = vsyncpa [#allocation12], 1
    %s658 = scalar_lea.sflag [#allocation12], 1
    %659 = vsyncpa %s658, 1

</llo_original>
